<compile_context>
chip_gen: v7x
topology: tpu7x:2x2x1
jax: 0.10.0
libtpu: 0.0.40
codegen_flags: <defaults>
</compile_context>

<pallas_src>
import functools

import jax
import jax.numpy as jnp
from jax import lax
from jax.experimental import pallas as pl
from jax.experimental.pallas import tpu as pltpu


def _label_smooth_ce_kernel(pred_ref, tgt_ref, loss_ref, *, smoothing, classes):
    pred = pred_ref[...].astype(jnp.float32)            # (TN, C) compute in f32
    tgt = tgt_ref[...]                                   # (TN, 1) int32

    # Stable log-softmax pieces (class axis lives on lanes).
    m = jnp.max(pred, axis=-1, keepdims=True)            # (TN, 1)
    shifted = pred - m
    lse = jnp.log(jnp.sum(jnp.exp(shifted), axis=-1, keepdims=True))   # (TN, 1)

    confidence = jnp.float32(1.0 - smoothing)
    off = jnp.float32(smoothing / (classes - 1))

    # sum_c(true_dist) == 1  =>  loss_row = -sum_c w_c*(shifted_c - lse)
    #                                     = lse - sum_c w_c*shifted_c
    col = lax.broadcasted_iota(jnp.int32, pred.shape, 1)  # (TN, C)
    w = jnp.where(col == tgt, confidence, off)
    weighted = jnp.sum(w * shifted, axis=-1, keepdims=True)             # (TN, 1)

    loss_ref[...] = lse - weighted


def _vmem_capacity_bytes():
    try:
        return int(pltpu.get_tpu_info().vmem_capacity_bytes)
    except Exception:
        return 64 * 1024 * 1024   # v7x per-TC capacity: safe lower bound


def _pick_block_rows(n, c, itemsize):
    """Largest row tile that keeps input double-buffers + f32 temps in VMEM."""
    vmem_cap = _vmem_capacity_bytes()
    usable = (vmem_cap * 3) // 5       # ~60% of VMEM for this kernel's data
    # Per logit element: 2x double-buffered native-dtype input tile plus
    # ~6 full-tile f32/i32 temporaries (cast, shifted, exp, iota, weight, prod).
    bytes_per_elem = 2 * itemsize + 6 * 4
    rows = usable // max(1, c * bytes_per_elem)
    align = 16 if itemsize < 4 else 8
    rows = max(align, (rows // align) * align)
    return int(min(rows, n)), vmem_cap


def label_smooth_cross_entropy(pred, target, *, smoothing=0.1, block_rows=None):
    """pred: (N, C) float logits (f32 or bf16); target: (N,) int labels.

    Returns the scalar mean label-smoothed cross-entropy (matches the PyTorch
    LabelSmoothCrossEntropyLoss forward).
    """
    N, C = pred.shape
    if C < 2:
        raise ValueError("label smoothing requires classes >= 2")
    assert 0.0 <= smoothing < 1.0

    itemsize = jnp.dtype(pred.dtype).itemsize
    align = 16 if itemsize < 4 else 8

    auto_rows, vmem_cap = _pick_block_rows(N, C, itemsize)
    if block_rows is None:
        block_rows = auto_rows
    block_rows = int(min(block_rows, N))
    if block_rows < N:
        # (8,128) tiling: sublane-align partial-grid blocks (16 for packed bf16).
        block_rows = max(align, (block_rows // align) * align)

    grid = (pl.cdiv(N, block_rows),)
    target2d = target.astype(jnp.int32).reshape(N, 1)

    kernel = functools.partial(
        _label_smooth_ce_kernel,
        smoothing=float(smoothing),
        classes=int(C),
    )

    # Request most of this generation's VMEM; tile sizing above already leaves
    # headroom for the f32 expansion of intermediates.
    vmem_limit = int(max(32 * 1024 * 1024, vmem_cap - 4 * 1024 * 1024))

    per_row = pl.pallas_call(
        kernel,
        out_shape=jax.ShapeDtypeStruct((N, 1), jnp.float32),
        grid_spec=pltpu.PrefetchScalarGridSpec(
            num_scalar_prefetch=0,
            grid=grid,
            in_specs=[
                pl.BlockSpec((block_rows, C), lambda i: (i, 0)),   # logits tile
                pl.BlockSpec((block_rows, 1), lambda i: (i, 0)),   # labels tile
            ],
            out_specs=pl.BlockSpec((block_rows, 1), lambda i: (i, 0)),
        ),
        compiler_params=pltpu.CompilerParams(
            dimension_semantics=("parallel",),   # independent row blocks
            vmem_limit_bytes=vmem_limit,
        ),
    )(pred, target2d)

    return jnp.sum(per_row) / jnp.float32(N)


def _reference(pred, target, *, smoothing=0.1):
    """Pure-JAX reference mirroring the PyTorch module exactly."""
    N, C = pred.shape
    logp = jax.nn.log_softmax(pred.astype(jnp.float32), axis=-1)
    confidence = 1.0 - smoothing
    true_dist = jnp.full((N, C), smoothing / (C - 1), dtype=jnp.float32)
    true_dist = true_dist.at[jnp.arange(N), target].set(confidence)
    return jnp.mean(jnp.sum(-true_dist * logp, axis=-1))


if __name__ == "__main__":
    key = jax.random.PRNGKey(0)
    k1, k2, k3, k4 = jax.random.split(key, 4)
    smoothing = 0.1

    # Test 1: bf16 logits, N not a multiple of block_rows -> multi-step parallel
    # grid with a partial last block (masked output writeback).
    N1, C1 = 60, 128
    pred1 = jax.random.normal(k1, (N1, C1), dtype=jnp.float32).astype(jnp.bfloat16)
    tgt1 = jax.random.randint(k2, (N1,), 0, C1, dtype=jnp.int32)
    loss1 = jax.block_until_ready(
        label_smooth_cross_entropy(pred1, tgt1, smoothing=smoothing, block_rows=16))
    ref1 = jax.block_until_ready(_reference(pred1, tgt1, smoothing=smoothing))
    assert jnp.allclose(loss1, ref1, rtol=1e-4, atol=1e-4), (loss1, ref1)

    # Test 2: f32 logits, C not a multiple of 128 (padded lanes), auto tile size
    # (single block at this small N).
    N2, C2 = 64, 96
    pred2 = jax.random.normal(k3, (N2, C2), dtype=jnp.float32)
    tgt2 = jax.random.randint(k4, (N2,), 0, C2, dtype=jnp.int32)
    loss2 = jax.block_until_ready(
        label_smooth_cross_entropy(pred2, tgt2, smoothing=smoothing))
    ref2 = jax.block_until_ready(_reference(pred2, tgt2, smoothing=smoothing))
    assert jnp.allclose(loss2, ref2, rtol=1e-5, atol=1e-5), (loss2, ref2)

    # Test 3: f32, exact tiling with multiple grid steps.
    loss3 = jax.block_until_ready(
        label_smooth_cross_entropy(pred2, tgt2, smoothing=smoothing, block_rows=16))
    assert jnp.allclose(loss3, ref2, rtol=1e-5, atol=1e-5), (loss3, ref2)

    print("KERNEL_OK")
</pallas_src>

<mosaic_0001>
module attributes {stable_mosaic.version = 11 : i64} {
  func.func @_label_smooth_ce_kernel(%arg0: i32, %arg1: memref<16x128xbf16, #tpu.memory_space<vmem>>, %arg2: memref<16x1xi32, #tpu.memory_space<vmem>>, %arg3: memref<16x1xf32, #tpu.memory_space<vmem>>) attributes {dimension_semantics = [#tpu.dimension_semantics<parallel>], iteration_bounds = array<i64: 4>, scalar_prefetch = 0 : i64, scratch_operands = 0 : i64, tpu.core_type = #tpu.core_type<tc>, window_params = [{transform_indices = @transform_0, window_bounds = array<i64: 16, 128>}, {transform_indices = @transform_1, window_bounds = array<i64: 16, 1>}, {transform_indices = @transform_2, window_bounds = array<i64: 16, 1>}]} {
    %c0 = arith.constant 0 : index
    %c0_0 = arith.constant 0 : index
    %0 = vector.load %arg1[%c0, %c0_0] : memref<16x128xbf16, #tpu.memory_space<vmem>>, vector<16x128xbf16>
    %1 = arith.extf %0 : vector<16x128xbf16> to vector<16x128xf32>
    %c0_1 = arith.constant 0 : index
    %c0_2 = arith.constant 0 : index
    %2 = vector.load %arg2[%c0_1, %c0_2] : memref<16x1xi32, #tpu.memory_space<vmem>>, vector<16x1xi32>
    %cst = arith.constant dense<0xFF800000> : vector<16xf32>
    %3 = vector.multi_reduction <maximumf>, %1, %cst [1] : vector<16x128xf32> to vector<16xf32>
    %4 = vector.shape_cast %3 : vector<16xf32> to vector<16x1xf32>
    %5 = vector.broadcast %4 : vector<16x1xf32> to vector<16x128xf32>
    %6 = arith.subf %1, %5 : vector<16x128xf32>
    %7 = math.exp %6 : vector<16x128xf32>
    %cst_3 = arith.constant dense<0.000000e+00> : vector<16xf32>
    %8 = vector.multi_reduction <add>, %7, %cst_3 [1] : vector<16x128xf32> to vector<16xf32>
    %9 = vector.shape_cast %8 : vector<16xf32> to vector<16x1xf32>
    %10 = math.log %9 : vector<16x1xf32>
    %11 = tpu.iota {dimensions = array<i32: 1>} : vector<16x128xi32>
    %12 = vector.broadcast %2 : vector<16x1xi32> to vector<16x128xi32>
    %13 = arith.cmpi eq, %11, %12 : vector<16x128xi32>
    %cst_4 = arith.constant 0.899999976 : f32
    %cst_5 = arith.constant 7.87401571E-4 : f32
    %14 = vector.broadcast %cst_4 : f32 to vector<16x128xf32>
    %15 = vector.broadcast %cst_5 : f32 to vector<16x128xf32>
    %16 = arith.select %13, %14, %15 : vector<16x128xi1>, vector<16x128xf32>
    %17 = arith.mulf %16, %6 : vector<16x128xf32>
    %cst_6 = arith.constant dense<0.000000e+00> : vector<16xf32>
    %18 = vector.multi_reduction <add>, %17, %cst_6 [1] : vector<16x128xf32> to vector<16xf32>
    %19 = vector.shape_cast %18 : vector<16xf32> to vector<16x1xf32>
    %20 = arith.subf %10, %19 : vector<16x1xf32>
    %c0_7 = arith.constant 0 : index
    %c0_8 = arith.constant 0 : index
    %21 = vector.load %arg3[%c0_7, %c0_8] : memref<16x1xf32, #tpu.memory_space<vmem>>, vector<16x1xf32>
    tpu.vector_store %arg3[%c0_7, %c0_8], %20 {strides = array<i32>} : memref<16x1xf32, #tpu.memory_space<vmem>>, vector<16x1xf32>,
    return
  }
  func.func @transform_0(%arg0: i32) -> (i32, i32) {
    %c0_i32 = arith.constant 0 : i32
    %c0_i32_0 = arith.constant 0 : i32
    return %arg0, %c0_i32 : i32, i32
  }
  func.func @transform_1(%arg0: i32) -> (i32, i32) {
    %c0_i32 = arith.constant 0 : i32
    %c0_i32_0 = arith.constant 0 : i32
    return %arg0, %c0_i32 : i32, i32
  }
  func.func @transform_2(%arg0: i32) -> (i32, i32) {
    %c0_i32 = arith.constant 0 : i32
    %c0_i32_0 = arith.constant 0 : i32
    return %arg0, %c0_i32 : i32, i32
  }
}

</mosaic_0001>

<llo_original>
// kernel: tpu_custom_call.1
$region0: #{tpu_custom_call.1}
  #allocation0 [shape = 'u32[]', space=smem, size = 0x4, offset = 0x4, fixed_abs, tag = 'smem constant byte address 0x4 - core index']
  #allocation1 [shape = 'u32[144,128]{1,0:T(1,128)}', space=vmem, size = 0x12000, scoped, tag = 'internal scratch']
  %s0 = inlined_call_operand.vmem [shape: bf16[60,128], index: 0, kind: input, shape index: {}]
  %s1 = inlined_call_operand.vmem [shape: s32[60,1], index: 1, kind: input, shape index: {}]
  %s2 = inlined_call_operand.vmem [shape: f32[60,1], index: 2, kind: output, shape index: {}]
  %s3 = sld [smem:[#allocation0]]
  $region41: #{tpu_custom_call.1} parent=0
    _
  %s5 = ssub.s32 1, %s3
  %s6 = scalar_select 0, %s5, %s3
  loop: start=0, step=1, limit=6
  $region2: #{tpu_custom_call.1} parent=0 // loop_pre_header
    _
  $region3: #{tpu_custom_call.1} parent=0 // loop_header
    %s8 = sphi 0, %s12
    %p9 = scmp.ge.s32.totalorder %s8, 6
    %s18 = sphi 0, %s20
    %s21 = sphi 0, %s18
    %s22 = sphi 0, %s21
    %s38 = sphi 0, %s22
    %s44 = sphi 0, %s46
    %s47 = sphi 0, %s44
    %s48 = sphi 0, %s47
    %s64 = sphi 0, %s48
    %s70 = sphi 0, %s72
    %s73 = sphi 0, %s70
    %s74 = sphi 0, %s73
    %s90 = sphi 0, %s74
  $region4: #{tpu_custom_call.1} parent=0 // loop_header_branch
    %11 = sbr.rel (%p9) target = $region8
  $region5: #{tpu_custom_call.1} parent=0 // loop_body
    %s13 = ssub.s32 %s8, 1
    %s14 = ssub.s32 %s8, 2
    %s15 = sadd.s32 %s8, 1
    %s16 = ssub.s32 %s8, %s15
    %p17 = scmp.eq.s32.totalorder %s16, 0
    %s19 = sadd.s32 %s18, 1
    %s20 = scalar_select %p17, %s18, %s19
    %p23 = pneg %p17
    %p24 = scmp.eq.s32.totalorder %s8, 3
    %p25 = por %p23, %p24
    %p26 = scmp.ne.s32.totalorder %s18, %s21
    %p27 = scmp.eq.s32.totalorder %s8, 0
    %p28 = por %p26, %p27
    %p29 = scmp.ne.s32.totalorder %s18, %s21
    %p30 = scmp.eq.s32.totalorder %s13, 3
    %p31 = por %p29, %p30
    %p32 = scmp.ne.s32.totalorder %s21, %s22
    %p33 = scmp.eq.s32.totalorder %s13, 0
    %p34 = por %p32, %p33
    %p35 = scmp.ne.s32.totalorder %s21, %s22
    %p36 = scmp.eq.s32.totalorder %s14, 3
    %p37 = por %p35, %p36
    %p39 = scmp.ne.s32.totalorder %s22, %s38
    %p40 = scmp.eq.s32.totalorder %s14, 0
    %p41 = por %p39, %p40
    %s42 = ssub.s32 %s8, %s15
    %p43 = scmp.eq.s32.totalorder %s42, 0
    %s45 = sadd.s32 %s44, 1
    %s46 = scalar_select %p43, %s44, %s45
    %p49 = pneg %p43
    %p50 = scmp.eq.s32.totalorder %s8, 3
    %p51 = por %p49, %p50
    %p52 = scmp.ne.s32.totalorder %s44, %s47
    %p53 = scmp.eq.s32.totalorder %s8, 0
    %p54 = por %p52, %p53
    %p55 = scmp.ne.s32.totalorder %s44, %s47
    %p56 = scmp.eq.s32.totalorder %s13, 3
    %p57 = por %p55, %p56
    %p58 = scmp.ne.s32.totalorder %s47, %s48
    %p59 = scmp.eq.s32.totalorder %s13, 0
    %p60 = por %p58, %p59
    %p61 = scmp.ne.s32.totalorder %s47, %s48
    %p62 = scmp.eq.s32.totalorder %s14, 3
    %p63 = por %p61, %p62
    %p65 = scmp.ne.s32.totalorder %s48, %s64
    %p66 = scmp.eq.s32.totalorder %s14, 0
    %p67 = por %p65, %p66
    %s68 = ssub.s32 %s8, %s15
    %p69 = scmp.eq.s32.totalorder %s68, 0
    %s71 = sadd.s32 %s70, 1
    %s72 = scalar_select %p69, %s70, %s71
    %p75 = pneg %p69
    %p76 = scmp.eq.s32.totalorder %s8, 3
    %p77 = por %p75, %p76
    %p78 = scmp.ne.s32.totalorder %s70, %s73
    %p79 = scmp.eq.s32.totalorder %s8, 0
    %p80 = por %p78, %p79
    %p81 = scmp.ne.s32.totalorder %s70, %s73
    %p82 = scmp.eq.s32.totalorder %s13, 3
    %p83 = por %p81, %p82
    %p84 = scmp.ne.s32.totalorder %s73, %s74
    %p85 = scmp.eq.s32.totalorder %s13, 0
    %p86 = por %p84, %p85
    %p87 = scmp.ne.s32.totalorder %s73, %s74
    %p88 = scmp.eq.s32.totalorder %s14, 3
    %p89 = por %p87, %p88
    %p91 = scmp.ne.s32.totalorder %s74, %s90
    %p92 = scmp.eq.s32.totalorder %s14, 0
    %p93 = por %p91, %p92
    %p94 = scmp.le.s32.totalorder 1, %s8
    %p95 = scmp.lt.s32.totalorder %s8, 5
    %p96 = pnand %p94, %p95
    %p97 = pneg %p96
    // Predicated region
    $region9: #{tpu_custom_call.1} parent=5 // pred_check
      _
    $region10: #{tpu_custom_call.1} parent=5 // pred_check_branch
      %99 = sbr.rel (%p96) target = $region12
    $region11: #{tpu_custom_call.1} parent=5 // pred_region
      %s100 = ssub.s32 %s8, 1
    $region12: #{tpu_custom_call.1} parent=5 // pred_fallthru
      _
    %p101 = scmp.lt.s32.totalorder %s8, 4
    // Predicated region
    $region13: #{tpu_custom_call.1} parent=5 // pred_check
      %p102 = pneg %p101
    $region14: #{tpu_custom_call.1} parent=5 // pred_check_branch
      %104 = sbr.rel (%p102) target = $region16
    $region15: #{tpu_custom_call.1} parent=5 // pred_region
      // Predicated region
      $region17: #{tpu_custom_call.1} parent=15 // pred_check
        %p105 = pneg %p28
      $region18: #{tpu_custom_call.1} parent=15 // pred_check_branch
        %107 = sbr.rel (%p105) target = $region20
      $region19: #{tpu_custom_call.1} parent=15 // pred_region
        %s108 = smul.u32 2, %s8
        %p109 = scmp.lt.s32.totalorder %s108, 7
        %s110 = scalar_select %p109, %s108, 7
        %s111 = smul.addr %s110, 4
        %s112 = scalar_lea.vmem %s0, %s111
        %s113 = smul.u32 2, %s8
      $region20: #{tpu_custom_call.1} parent=15 // pred_fallthru
        _
      // Predicated region
      $region21: #{tpu_custom_call.1} parent=15 // pred_check
        %p114 = pneg %p54
      $region22: #{tpu_custom_call.1} parent=15 // pred_check_branch
        %116 = sbr.rel (%p114) target = $region24
      $region23: #{tpu_custom_call.1} parent=15 // pred_region
        %s117 = smul.u32 2, %s8
        %p118 = scmp.lt.s32.totalorder %s117, 7
        %s119 = scalar_select %p118, %s117, 7
        %s120 = smul.addr %s119, 8
        %s121 = scalar_lea.vmem %s1, %s120
        %s122 = smul.u32 2, %s8
      $region24: #{tpu_custom_call.1} parent=15 // pred_fallthru
        _
    $region16: #{tpu_custom_call.1} parent=5 // pred_fallthru
      _
    %p123 = scmp.le.s32.totalorder 1, %s8
    %p124 = scmp.lt.s32.totalorder %s8, 5
    %p125 = pnand %p123, %p124
    %p126 = pneg %p125
    // Predicated region
    $region25: #{tpu_custom_call.1} parent=5 // pred_check
      _
    $region26: #{tpu_custom_call.1} parent=5 // pred_check_branch
      %128 = sbr.rel (%p125) target = $region28
    $region27: #{tpu_custom_call.1} parent=5 // pred_region
      %s129 = ssub.s32 %s8, 1
      %s130 = smul.u32 2, %s13
      %p131 = scmp.lt.s32.totalorder %s130, 7
      %s132 = scalar_select %p131, %s130, 7
      %s133 = smul.addr %s132, 4
      %s134 = scalar_lea.vmem %s0, %s133
      %p135 = pneg %p34
      %p136 = pneg %p31
      %s137 = smul.u32 2, %s13
      %p138 = scmp.lt.s32.totalorder %s137, 7
      %s139 = scalar_select %p138, %s137, 7
      %s140 = smul.addr %s139, 8
      %s141 = scalar_lea.vmem %s1, %s140
      %p142 = pneg %p60
      %p143 = pneg %p57
      %p144 = pneg %p86
      %p145 = pneg %p83
      %s146 = smul.u32 2, %s13
      %p147 = scmp.lt.s32.totalorder %s146, 7
      %s148 = scalar_select %p147, %s146, 7
      %s149 = smul.addr %s148, 8
      %s150 = scalar_lea.vmem %s2, %s149
      %s151 = smul.u32 2, %s13
      %p152 = scmp.lt.s32.totalorder %s151, 7
      %s153 = scalar_select %p152, %s151, 7
      %s154 = smul.addr %s153, 4
      %s155 = scalar_lea.vmem %s0, %s154
      %s156 = smul.u32 2, %s13
      %s157 = smul.u32 2, %s13
      %p158 = scmp.lt.s32.totalorder %s157, 7
      %s159 = scalar_select %p158, %s157, 7
      %s160 = smul.addr %s159, 8
      %s161 = scalar_lea.vmem %s1, %s160
      %s162 = smul.u32 2, %s13
      %s163 = smul.u32 2, %s13
      %p164 = scmp.lt.s32.totalorder %s163, 7
      %s165 = scalar_select %p164, %s163, 7
      %s166 = smul.addr %s165, 8
      %s167 = scalar_lea.vmem %s2, %s166
      %s168 = smul.u32 2, %s13
      %v169 = vld [vmem:[%s155] sm:$0xf]
      %v170 = vld [vmem:[%s155 + $0x4] sm:$0xf]
      %v171 = vunpack.c.l.bf16 %v169
      %v172 = vunpack.c.l.bf16 %v170
      %v173 = vld [vmem:[%s161] sm:$0xff]
      %v174 = vld [vmem:[%s161 + $0x8] sm:$0xff]
      %175 = vmax.xlane.f32.xlu0 %v171
      %v176 = vpop.xlane.xlu0 %175
      %177 = vmax.xlane.f32.xlu0 %v172
      %v178 = vpop.xlane.xlu0 %177
      %v179 = vsub.f32 %v171, %v176
      %v180 = vsub.f32 %v172, %v178
      %v181 = vmul.f32 %v179, 1.442695
      %v182 = vpow.pop %v181
      %v183 = vmul.f32 %v180, 1.442695
      %v184 = vpow.pop %v183
      %185 = vadd.xlane.f32.xlu0 %v182
      %v186 = vpop.xlane.xlu0 %185
      %187 = vadd.xlane.f32.xlu0 %v184
      %v188 = vpop.xlane.xlu0 %187
      %v189 = vlog2.pop %v186
      %v190 = vmul.f32 %v189, 0.6931472
      %v191 = vlog2.pop %v188
      %v192 = vmul.f32 %v191, 0.6931472
      %v193 = vlaneseq
      %v194 = vand.u32 %v193, 127
      %195 = vset.pattern.permute.xlu0 0
      %196 = vperm.xlu0 %195, %v173
      %v197 = vpop.permute.xlu0 %196
      %198 = vset.pattern.permute.xlu0 0
      %199 = vperm.xlu0 %198, %v174
      %v200 = vpop.permute.xlu0 %199
      %vm201 = vcmp.eq.s32.totalorder %v194, %v197
      %vm202 = vcmp.eq.s32.totalorder %v194, %v200
      %v203 = vsel %vm201, 0.9, 0.0007874016
      %v204 = vsel %vm202, 0.9, 0.0007874016
      %v205 = vmul.f32 %v203, %v179
      %v206 = vmul.f32 %v204, %v180
      %207 = vadd.xlane.f32.xlu0 %v205
      %v208 = vpop.xlane.xlu0 %207
      %209 = vadd.xlane.f32.xlu0 %v206
      %v210 = vpop.xlane.xlu0 %209
      %v211 = vsub.f32 %v190, %v208
      %v212 = vsub.f32 %v192, %v210
      %vm213 = vcmask 7168
      %214 = vst.msk [vmem:[%s167] sm:$0xff] %vm213, %v211
      %215 = vst.msk [vmem:[%s167 + $0x8] sm:$0xff] %vm213, %v212
      %s216 = smul.u32 2, %s13
      %p217 = scmp.lt.s32.totalorder %s216, 7
      %s218 = scalar_select %p217, %s216, 7
      %s219 = smul.addr %s218, 8
      %s220 = scalar_lea.vmem %s2, %s219
      // Predicated region
      $region29: #{tpu_custom_call.1} parent=27 // pred_check
        %p221 = pneg %p83
      $region30: #{tpu_custom_call.1} parent=27 // pred_check_branch
        %223 = sbr.rel (%p221) target = $region32
      $region31: #{tpu_custom_call.1} parent=27 // pred_region
        %s224 = smul.u32 2, %s13
      $region32: #{tpu_custom_call.1} parent=27 // pred_fallthru
        _
    $region28: #{tpu_custom_call.1} parent=5 // pred_fallthru
      _
    %p225 = scmp.le.s32.totalorder 2, %s8
    // Predicated region
    $region33: #{tpu_custom_call.1} parent=5 // pred_check
      %p226 = pneg %p225
    $region34: #{tpu_custom_call.1} parent=5 // pred_check_branch
      %228 = sbr.rel (%p226) target = $region36
    $region35: #{tpu_custom_call.1} parent=5 // pred_region
      %s229 = ssub.s32 %s8, 2
      // Predicated region
      $region37: #{tpu_custom_call.1} parent=35 // pred_check
        %p230 = pneg %p89
      $region38: #{tpu_custom_call.1} parent=35 // pred_check_branch
        %232 = sbr.rel (%p230) target = $region40
      $region39: #{tpu_custom_call.1} parent=35 // pred_region
        %s233 = smul.u32 2, %s14
        %p234 = scmp.lt.s32.totalorder %s233, 7
        %s235 = scalar_select %p234, %s233, 7
        %s236 = smul.addr %s235, 8
        %s237 = scalar_lea.vmem %s2, %s236
      $region40: #{tpu_custom_call.1} parent=35 // pred_fallthru
        _
    $region36: #{tpu_custom_call.1} parent=5 // pred_fallthru
      _
  $region6: #{tpu_custom_call.1} parent=0 // loop_footer
    %s12 = sadd.s32 1, %s8
  $region7: #{tpu_custom_call.1} parent=0 // loop_footer_branch
    %7 = sbr.rel target = $region3
  $region8: #{tpu_custom_call.1} parent=0 // loop_exit
    _

</llo_original>
